<compile_context>
chip_gen: v7x
topology: tpu7x:2x2x1
jax: 0.10.0
libtpu: 0.0.40
codegen_flags: <defaults>
</compile_context>

<pallas_src>
import jax
import jax.numpy as jnp
from jax.experimental import pallas as pl
from jax.experimental.pallas import tpu as pltpu


def ca_net_kernel(x_ref, w_ref, b_ref, eps_ref, c_ref, mu_ref, lv_ref):
    # x_ref:   [tB, T]    text-embedding tile (matmul dtype, e.g. bf16)
    # w_ref:   [T, 4C]    fc weight in natural x @ W^T layout (matmul dtype)
    # b_ref:   [1, 4C]    fc bias (fp32)
    # eps_ref: [tB, C]    reparametrization noise tile (fp32)
    # c_ref, mu_ref, lv_ref: [tB, C] outputs (fp32)
    C = mu_ref.shape[-1]

    # Single fused MXU push; fp32 accumulation regardless of operand dtype.
    y = jnp.dot(x_ref[...], w_ref[...],
                preferred_element_type=jnp.float32) + b_ref[...]

    # GLU: h = y[:, :2C] * sigmoid(y[:, 2C:]); then mu = h[:, :C], logvar = h[:, C:].
    # Static lane slices on the fp32 dot result (free when C % 128 == 0).
    mu = y[:, :C] * jax.nn.sigmoid(y[:, 2 * C:3 * C])
    logvar = y[:, C:2 * C] * jax.nn.sigmoid(y[:, 3 * C:])

    # Reparametrize: c_code = eps * exp(0.5 * logvar) + mu  (exp rides the EUP).
    c_code = eps_ref[...] * jnp.exp(0.5 * logvar) + mu

    # Direct per-output stores: no lane concatenate, no wrapper re-slicing.
    c_ref[...] = c_code.astype(c_ref.dtype)
    mu_ref[...] = mu.astype(mu_ref.dtype)
    lv_ref[...] = logvar.astype(lv_ref.dtype)


def _choose_tile_b(B, block_b, min_grid_steps):
    """Batch tile: <= block_b rows, a multiple of 8 sublanes, and (when B allows)
    at least `min_grid_steps` grid steps so both v7x TensorCores get work."""
    tile = min(B, block_b)
    if B > 8:
        per_step = -(-B // min_grid_steps)            # cdiv(B, min_grid_steps)
        per_step = max(8, -(-per_step // 8) * 8)      # round up to sublane multiple
        tile = min(tile, per_step)
    if tile != B and tile % 8 != 0:
        tile = B                                       # keep the block sublane-aligned
    return tile


def ca_net_forward(x, w_t, b, eps, *, block_b=1024, min_grid_steps=2,
                   matmul_dtype=jnp.bfloat16):
    """CA_NET forward.

    x:   [B, t_dim]        text embedding (fp32)
    w_t: [t_dim, 4*c_dim]  fc weight in natural matmul layout (W^T of the PyTorch
                           [4*c_dim, t_dim] weight; transform once at load time)
    b:   [4*c_dim]         fc bias
    eps: [B, c_dim]        N(0,1) noise
    returns (c_code, mu, logvar), each [B, c_dim] float32.
    """
    B, T = x.shape
    C4 = w_t.shape[1]
    C = C4 // 4
    assert w_t.shape == (T, C4) and b.shape == (C4,) and eps.shape == (B, C)

    # bf16 matmul operands halve the dominant input HBM traffic; accumulation
    # stays fp32 in-kernel.  In production, store the weight in matmul_dtype at
    # parameter-load time so this cast is not a per-call op.
    x_in = x.astype(matmul_dtype)
    w_in = w_t.astype(matmul_dtype)
    b2d = b.reshape(1, C4).astype(jnp.float32)
    eps_in = eps.astype(jnp.float32)

    tile_b = _choose_tile_b(B, block_b, min_grid_steps)
    grid = (pl.cdiv(B, tile_b),)

    out_sds = jax.ShapeDtypeStruct((B, C), jnp.float32)
    # NOTE: when the deployed c_dim is < 128, pad C to 128 (or put batch on the
    # lane axis) to avoid masked vst.msk partial stores; with c_dim=128 each of
    # these per-output stores is already lane-dense.
    out_spec = pl.BlockSpec((tile_b, C), lambda i: (i, 0))

    c_code, mu, logvar = pl.pallas_call(
        ca_net_kernel,
        out_shape=(out_sds, out_sds, out_sds),
        grid_spec=pltpu.PrefetchScalarGridSpec(
            num_scalar_prefetch=0,
            grid=grid,
            in_specs=[
                pl.BlockSpec((tile_b, T), lambda i: (i, 0)),   # x tile
                # Constant index_map -> weight/bias DMA'd once, VMEM-resident.
                # (On v7x, pipeline_mode=pl.Buffered(1) could halve their VMEM
                # footprint if batch tiles ever need the headroom.)
                pl.BlockSpec((T, C4), lambda i: (0, 0)),       # weight
                pl.BlockSpec((1, C4), lambda i: (0, 0)),       # bias
                pl.BlockSpec((tile_b, C), lambda i: (i, 0)),   # eps tile
            ],
            out_specs=(out_spec, out_spec, out_spec),
        ),
        compiler_params=pltpu.CompilerParams(
            dimension_semantics=("parallel",),   # batch tiles shard across TCs (v7x)
        ),
    )(x_in, w_in, b2d, eps_in)

    return c_code, mu, logvar


if __name__ == "__main__":
    # Small shapes consistent with the module.
    B = 8
    EMBEDDING_DIM = 32     # t_dim
    CONDITION_DIM = 16     # c_dim

    key = jax.random.PRNGKey(0)
    k_x, k_w, k_b, k_eps = jax.random.split(key, 4)

    x = jax.random.normal(k_x, (B, EMBEDDING_DIM), dtype=jnp.float32)
    w = jax.random.normal(k_w, (4 * CONDITION_DIM, EMBEDDING_DIM), dtype=jnp.float32) * 0.1
    b = jax.random.normal(k_b, (4 * CONDITION_DIM,), dtype=jnp.float32) * 0.1
    # Deterministic stand-in for torch.FloatTensor(...).normal_()
    eps = jax.random.normal(k_eps, (B, CONDITION_DIM), dtype=jnp.float32)

    # One-time parameter-load-time layout: [t_dim, 4*c_dim] (= W^T).
    w_t = w.T

    # Pure-JAX fp32 reference (fused linear + GLU + reparametrize).
    y_ref = x @ w_t + b
    h_ref = y_ref[:, :2 * CONDITION_DIM] * jax.nn.sigmoid(y_ref[:, 2 * CONDITION_DIM:])
    mu_ref = h_ref[:, :CONDITION_DIM]
    lv_ref = h_ref[:, CONDITION_DIM:]
    c_ref = eps * jnp.exp(0.5 * lv_ref) + mu_ref

    # Exact-parity path (fp32 matmul operands).
    c32, m32, l32 = ca_net_forward(x, w_t, b, eps, matmul_dtype=jnp.float32)
    jax.block_until_ready((c32, m32, l32))
    assert jnp.allclose(m32, mu_ref, atol=1e-5)
    assert jnp.allclose(l32, lv_ref, atol=1e-5)
    assert jnp.allclose(c32, c_ref, atol=1e-5)

    # Bandwidth-optimized default path (bf16 matmul operands, fp32 accumulate).
    c_code, mu, logvar = ca_net_forward(x, w_t, b, eps)
    jax.block_until_ready((c_code, mu, logvar))
    assert jnp.allclose(mu, mu_ref, atol=3e-2)
    assert jnp.allclose(logvar, lv_ref, atol=3e-2)
    assert jnp.allclose(c_code, c_ref, atol=3e-2)

    print("KERNEL_OK")
</pallas_src>

<mosaic_0001>
module attributes {stable_mosaic.version = 11 : i64} {
  func.func @ca_net_kernel(%arg0: i32, %arg1: memref<8x32xf32, #tpu.memory_space<vmem>>, %arg2: memref<32x64xf32, #tpu.memory_space<vmem>>, %arg3: memref<1x64xf32, #tpu.memory_space<vmem>>, %arg4: memref<8x16xf32, #tpu.memory_space<vmem>>, %arg5: memref<8x16xf32, #tpu.memory_space<vmem>>, %arg6: memref<8x16xf32, #tpu.memory_space<vmem>>, %arg7: memref<8x16xf32, #tpu.memory_space<vmem>>) attributes {dimension_semantics = [#tpu.dimension_semantics<parallel>], iteration_bounds = array<i64: 1>, scalar_prefetch = 0 : i64, scratch_operands = 0 : i64, tpu.core_type = #tpu.core_type<tc>, window_params = [{transform_indices = @transform_0, window_bounds = array<i64: 8, 32>}, {pipeline_mode = #tpu.pipeline_mode<synchronous>, transform_indices = @transform_1, window_bounds = array<i64: 32, 64>}, {pipeline_mode = #tpu.pipeline_mode<synchronous>, transform_indices = @transform_2, window_bounds = array<i64: 1, 64>}, {transform_indices = @transform_3, window_bounds = array<i64: 8, 16>}, {transform_indices = @transform_4, window_bounds = array<i64: 8, 16>}, {transform_indices = @transform_5, window_bounds = array<i64: 8, 16>}, {transform_indices = @transform_6, window_bounds = array<i64: 8, 16>}]} {
    %c0 = arith.constant 0 : index
    %c0_0 = arith.constant 0 : index
    %0 = vector.load %arg1[%c0, %c0_0] : memref<8x32xf32, #tpu.memory_space<vmem>>, vector<8x32xf32>
    %c0_1 = arith.constant 0 : index
    %c0_2 = arith.constant 0 : index
    %1 = vector.load %arg2[%c0_1, %c0_2] : memref<32x64xf32, #tpu.memory_space<vmem>>, vector<32x64xf32>
    %cst = arith.constant dense<0.000000e+00> : vector<8x64xf32>
    %2 = tpu.matmul %0, %1, %cst {dimension_numbers = #tpu.dot_dimension_numbers<[1], [0], [0], [1], [0, 0, 1, 1], [], []>} : vector<8x32xf32>, vector<32x64xf32>, vector<8x64xf32> -> vector<8x64xf32>
    %c0_3 = arith.constant 0 : index
    %c0_4 = arith.constant 0 : index
    %3 = vector.load %arg3[%c0_3, %c0_4] : memref<1x64xf32, #tpu.memory_space<vmem>>, vector<1x64xf32>
    %4 = vector.broadcast %3 : vector<1x64xf32> to vector<8x64xf32>
    %5 = arith.addf %2, %4 : vector<8x64xf32>
    %6 = vector.extract_strided_slice %5 {offsets = [0, 0], sizes = [8, 16], strides = [1, 1]} : vector<8x64xf32> to vector<8x16xf32>
    %7 = vector.extract_strided_slice %5 {offsets = [0, 32], sizes = [8, 16], strides = [1, 1]} : vector<8x64xf32> to vector<8x16xf32>
    %8 = arith.negf %7 : vector<8x16xf32>
    %9 = math.exp %8 : vector<8x16xf32>
    %cst_5 = arith.constant 1.000000e+00 : f32
    %10 = vector.broadcast %cst_5 : f32 to vector<8x16xf32>
    %11 = arith.addf %10, %9 : vector<8x16xf32>
    %12 = arith.divf %10, %11 : vector<8x16xf32>
    %13 = arith.mulf %6, %12 : vector<8x16xf32>
    %14 = vector.extract_strided_slice %5 {offsets = [0, 16], sizes = [8, 16], strides = [1, 1]} : vector<8x64xf32> to vector<8x16xf32>
    %15 = vector.extract_strided_slice %5 {offsets = [0, 48], sizes = [8, 16], strides = [1, 1]} : vector<8x64xf32> to vector<8x16xf32>
    %16 = arith.negf %15 : vector<8x16xf32>
    %17 = math.exp %16 : vector<8x16xf32>
    %cst_6 = arith.constant 1.000000e+00 : f32
    %18 = vector.broadcast %cst_6 : f32 to vector<8x16xf32>
    %19 = arith.addf %18, %17 : vector<8x16xf32>
    %20 = arith.divf %18, %19 : vector<8x16xf32>
    %21 = arith.mulf %14, %20 : vector<8x16xf32>
    %c0_7 = arith.constant 0 : index
    %c0_8 = arith.constant 0 : index
    %22 = vector.load %arg4[%c0_7, %c0_8] : memref<8x16xf32, #tpu.memory_space<vmem>>, vector<8x16xf32>
    %cst_9 = arith.constant 5.000000e-01 : f32
    %23 = vector.broadcast %cst_9 : f32 to vector<8x16xf32>
    %24 = arith.mulf %23, %21 : vector<8x16xf32>
    %25 = math.exp %24 : vector<8x16xf32>
    %26 = arith.mulf %22, %25 : vector<8x16xf32>
    %27 = arith.addf %26, %13 : vector<8x16xf32>
    %c0_10 = arith.constant 0 : index
    %c0_11 = arith.constant 0 : index
    %28 = vector.load %arg5[%c0_10, %c0_11] : memref<8x16xf32, #tpu.memory_space<vmem>>, vector<8x16xf32>
    tpu.vector_store %arg5[%c0_10, %c0_11], %27 {strides = array<i32>} : memref<8x16xf32, #tpu.memory_space<vmem>>, vector<8x16xf32>,
    %c0_12 = arith.constant 0 : index
    %c0_13 = arith.constant 0 : index
    %29 = vector.load %arg6[%c0_12, %c0_13] : memref<8x16xf32, #tpu.memory_space<vmem>>, vector<8x16xf32>
    tpu.vector_store %arg6[%c0_12, %c0_13], %13 {strides = array<i32>} : memref<8x16xf32, #tpu.memory_space<vmem>>, vector<8x16xf32>,
    %c0_14 = arith.constant 0 : index
    %c0_15 = arith.constant 0 : index
    %30 = vector.load %arg7[%c0_14, %c0_15] : memref<8x16xf32, #tpu.memory_space<vmem>>, vector<8x16xf32>
    tpu.vector_store %arg7[%c0_14, %c0_15], %21 {strides = array<i32>} : memref<8x16xf32, #tpu.memory_space<vmem>>, vector<8x16xf32>,
    return
  }
  func.func @transform_0(%arg0: i32) -> (i32, i32) {
    %c0_i32 = arith.constant 0 : i32
    %c0_i32_0 = arith.constant 0 : i32
    return %arg0, %c0_i32 : i32, i32
  }
  func.func @transform_1(%arg0: i32) -> (i32, i32) {
    %c0_i32 = arith.constant 0 : i32
    %c0_i32_0 = arith.constant 0 : i32
    %c0_i32_1 = arith.constant 0 : i32
    return %c0_i32, %c0_i32_0 : i32, i32
  }
  func.func @transform_2(%arg0: i32) -> (i32, i32) {
    %c0_i32 = arith.constant 0 : i32
    %c0_i32_0 = arith.constant 0 : i32
    %c0_i32_1 = arith.constant 0 : i32
    return %c0_i32, %c0_i32_0 : i32, i32
  }
  func.func @transform_3(%arg0: i32) -> (i32, i32) {
    %c0_i32 = arith.constant 0 : i32
    %c0_i32_0 = arith.constant 0 : i32
    return %arg0, %c0_i32 : i32, i32
  }
  func.func @transform_4(%arg0: i32) -> (i32, i32) {
    %c0_i32 = arith.constant 0 : i32
    %c0_i32_0 = arith.constant 0 : i32
    return %arg0, %c0_i32 : i32, i32
  }
  func.func @transform_5(%arg0: i32) -> (i32, i32) {
    %c0_i32 = arith.constant 0 : i32
    %c0_i32_0 = arith.constant 0 : i32
    return %arg0, %c0_i32 : i32, i32
  }
  func.func @transform_6(%arg0: i32) -> (i32, i32) {
    %c0_i32 = arith.constant 0 : i32
    %c0_i32_0 = arith.constant 0 : i32
    return %arg0, %c0_i32 : i32, i32
  }
}

</mosaic_0001>

<llo_original>
// kernel: tpu_custom_call.1
$region0: #{tpu_custom_call.1}
  #allocation0 [shape = 'u32[]', space=smem, size = 0x4, offset = 0x4, fixed_abs, tag = 'smem constant byte address 0x4 - core index']
  #allocation1 [shape = 'u32[144,128]{1,0:T(1,128)}', space=vmem, size = 0x12000, scoped, tag = 'internal scratch']
  %s0 = inlined_call_operand.hbm [shape: f32[8,32], index: 0, kind: input, shape index: {}]
  %s1 = inlined_call_operand.hbm [shape: f32[32,64], index: 1, kind: input, shape index: {}]
  %s2 = inlined_call_operand.vmem [shape: f32[1,64], index: 2, kind: input, shape index: {}]
  %s3 = inlined_call_operand.vmem [shape: f32[8,16], index: 3, kind: input, shape index: {}]
  %s4 = inlined_call_operand.hbm [shape: f32[8,16], index: 4, kind: output, shape index: {0}]
  %s5 = inlined_call_operand.hbm [shape: f32[8,16], index: 5, kind: output, shape index: {1}]
  %s6 = inlined_call_operand.hbm [shape: f32[8,16], index: 6, kind: output, shape index: {2}]
  %7 = xla_tuple %s4, %s5, %s6
  %s8 = sld [smem:[#allocation0]]
  $region50: #{tpu_custom_call.1} parent=0
    _
  %s10 = ssub.s32 1, %s8
  %s11 = scalar_select 0, %s10, %s8
  $region1: #{tpu_custom_call.1} parent=0
    #allocation2 [shape = 'u8[4096]{0}', space=vmem, size = 0x1000, scoped, tag = 'input window, operand 0, single buffered']
    #allocation3 [shape = 's32[1]{0}', space=sflag, size = 0x4, scoped, tag = 'scoped memory for tpu_custom_call.1']
    #allocation4 [shape = 's32[1]{0}', space=sflag, size = 0x4, scoped, tag = 'scoped memory for tpu_custom_call.1']
    #allocation5 [shape = 'u8[16384]{0}', space=vmem, size = 0x4000, scoped, tag = 'input window, operand 1, single buffered']
    #allocation6 [shape = 's32[1]{0}', space=sflag, size = 0x4, scoped, tag = 'scoped memory for tpu_custom_call.1']
    #allocation7 [shape = 'u8[4096]{0}', space=vmem, size = 0x1000, scoped, tag = 'output window, operand 0, single buffered']
    #allocation8 [shape = 'u8[4096]{0}', space=vmem, size = 0x1000, scoped, tag = 'output window, operand 1, single buffered']
    #allocation9 [shape = 's32[1]{0}', space=sflag, size = 0x4, scoped, tag = 'scoped memory for tpu_custom_call.1']
    #allocation10 [shape = 'u8[4096]{0}', space=vmem, size = 0x1000, scoped, tag = 'output window, operand 2, single buffered']
    %12 = vsyncpa [#allocation3], 0
    %13 = vsyncpa [#allocation6], 0
    %14 = vsyncpa [#allocation4], 0
    %15 = vsyncpa [#allocation9], 0
    // Predicated region
    $region2: #{tpu_custom_call.1} parent=1 // pred_check
      _
    $region3: #{tpu_custom_call.1} parent=1 // pred_check_branch
      %17 = sbr.rel (0) target = $region5
    $region4: #{tpu_custom_call.1} parent=1 // pred_region
      %s19 = ssub.s32 128, 128
      %20 = vsyncadd [#allocation3], %s19
      %s22 = sshll.u32 [#allocation2], 4
      %s23 = int_to_ptr.vmem [resolvable:$true] %s22
      %25 = dma.hbm_to_vmem [thread:$0]  %s0, 128, %s23, [#allocation3]
    $region5: #{tpu_custom_call.1} parent=1 // pred_fallthru
      _
    // Predicated region
    $region6: #{tpu_custom_call.1} parent=1 // pred_check
      _
    $region7: #{tpu_custom_call.1} parent=1 // pred_check_branch
      %27 = sbr.rel (0) target = $region9
    $region8: #{tpu_custom_call.1} parent=1 // pred_region
      %s29 = ssub.s32 512, 512
      %30 = vsyncadd [#allocation6], %s29
      %s31 = sshll.u32 [#allocation5], 4
      %s32 = int_to_ptr.vmem [resolvable:$true] %s31
      %37 = dma.hbm_to_vmem [thread:$0]  %s1, 512, %s32, [#allocation6], 128, 128, 8
    $region9: #{tpu_custom_call.1} parent=1 // pred_fallthru
      _
    // Predicated region
    $region10: #{tpu_custom_call.1} parent=1 // pred_check
      _
    $region11: #{tpu_custom_call.1} parent=1 // pred_check_branch
      %39 = sbr.rel (0) target = $region13
    $region12: #{tpu_custom_call.1} parent=1 // pred_region
      _
    $region13: #{tpu_custom_call.1} parent=1 // pred_fallthru
      _
    // Predicated region
    $region14: #{tpu_custom_call.1} parent=1 // pred_check
      _
    $region15: #{tpu_custom_call.1} parent=1 // pred_check_branch
      %41 = sbr.rel (0) target = $region17
    $region16: #{tpu_custom_call.1} parent=1 // pred_region
      _
    $region17: #{tpu_custom_call.1} parent=1 // pred_fallthru
      _
    // Predicated region
    $region18: #{tpu_custom_call.1} parent=1 // pred_check
      _
    $region19: #{tpu_custom_call.1} parent=1 // pred_check_branch
      %43 = sbr.rel (0) target = $region21
    $region20: #{tpu_custom_call.1} parent=1 // pred_region
      %44 = dma.done [#allocation3], 128
    $region21: #{tpu_custom_call.1} parent=1 // pred_fallthru
      _
    // Predicated region
    $region22: #{tpu_custom_call.1} parent=1 // pred_check
      _
    $region23: #{tpu_custom_call.1} parent=1 // pred_check_branch
      %46 = sbr.rel (0) target = $region25
    $region24: #{tpu_custom_call.1} parent=1 // pred_region
      %47 = dma.done [#allocation6], 512
    $region25: #{tpu_custom_call.1} parent=1 // pred_fallthru
      _
    %v48 = vld [vmem:[#allocation2] sm:$0xff]
    %v49 = vld [vmem:[#allocation5] sm:$0xff]
    %v50 = vld [vmem:[#allocation5 + $0x8] sm:$0xff]
    %v51 = vld [vmem:[#allocation5 + $0x10] sm:$0xff]
    %v52 = vld [vmem:[#allocation5 + $0x18] sm:$0xff]
    %v53 = vld [vmem:[%s2] sm:$0x1]
    %v55 = vlaneseq
    %v56 = vshrl.u32 %v55, 7
    %v57 = vsub.s32 0, %v56
    %v58 = vrot.slane %v53, %v57
    %vm60 = vcmask 261120
    %v62 = vsel %vm60, %v48, 0
    %64 = vmatprep.subr.mxu0 0.0
    %65 = vmatpush1.msra.mxu0 %v49
    %66 = vmatprep.subr.mxu0 0.0
    %67 = vmatpush1.msra.mxu0 %v50
    %68 = vmatprep.subr.mxu0 0.0
    %69 = vmatpush1.msra.mxu0 %v51
    %70 = vmatprep.subr.mxu0 0.0
    %71 = vmatpush1.msra.mxu0 %v52
    %72 = vmatprep.subr.mxu0 0.0
    %73 = vmatpush1.msra.mxu0 0.0
    %74 = vmatprep.subr.mxu0 0.0
    %75 = vmatpush1.msra.mxu0 0.0
    %76 = vmatprep.subr.mxu0 0.0
    %77 = vmatpush1.msra.mxu0 0.0
    %78 = vmatprep.subr.mxu0 0.0
    %79 = vmatpush1.msra.mxu0 0.0
    %80 = vmatprep.subr.mxu0 0.0
    %81 = vmatpush1.msra.mxu0 0.0
    %82 = vmatprep.subr.mxu0 0.0
    %83 = vmatpush1.msra.mxu0 0.0
    %84 = vmatprep.subr.mxu0 0.0
    %85 = vmatpush1.msra.mxu0 0.0
    %86 = vmatprep.subr.mxu0 0.0
    %87 = vmatpush1.msra.mxu0 0.0
    %88 = vmatprep.subr.mxu0 0.0
    %89 = vmatpush1.msra.mxu0 0.0
    %90 = vmatprep.subr.mxu0 0.0
    %91 = vmatpush1.msra.mxu0 0.0
    %92 = vmatprep.subr.mxu0 0.0
    %93 = vmatpush1.msra.mxu0 0.0
    %94 = vmatprep.subr.mxu0 0.0
    %95 = vmatpush1.msra.mxu0 0.0
    %96 = vmatprep.subr.mxu0 0.0
    %97 = vmatpush1.msra.mxu0 0.0
    %98 = vmatprep.subr.mxu0 0.0
    %99 = vmatpush1.msra.mxu0 0.0
    %100 = vmatprep.subr.mxu0 0.0
    %101 = vmatpush1.msra.mxu0 0.0
    %102 = vmatprep.subr.mxu0 0.0
    %103 = vmatpush1.msra.mxu0 0.0
    %104 = vmatprep.subr.mxu0 0.0
    %105 = vmatpush1.msra.mxu0 0.0
    %106 = vmatprep.subr.mxu0 0.0
    %107 = vmatpush1.msra.mxu0 0.0
    %108 = vmatprep.subr.mxu0 0.0
    %109 = vmatpush1.msra.mxu0 0.0
    %110 = vmatprep.subr.mxu0 0.0
    %111 = vmatpush1.msra.mxu0 0.0
    %112 = vmatprep.subr.mxu0 0.0
    %113 = vmatpush1.msra.mxu0 0.0
    %114 = vmatprep.subr.mxu0 0.0
    %115 = vmatpush1.msra.mxu0 0.0
    %116 = vmatprep.subr.mxu0 0.0
    %117 = vmatpush1.msra.mxu0 0.0
    %118 = vmatprep.subr.mxu0 0.0
    %119 = vmatpush1.msra.mxu0 0.0
    %120 = vmatprep.subr.mxu0 0.0
    %121 = vmatpush1.msra.mxu0 0.0
    %122 = vmatprep.subr.mxu0 0.0
    %123 = vmatpush1.msra.mxu0 0.0
    %124 = vmatprep.subr.mxu0 0.0
    %125 = vmatpush1.msra.mxu0 0.0
    %126 = vmatprep.subr.mxu0 0.0
    %127 = vmatpush1.msra.mxu0 0.0
    %128 = vmatprep.mubr.f32.mxu0 0.0
    %129 = vmatmul.mubr.f32.gmra.mrb[0].mxu0 %v62
    %v130 = vpop.f32.mrb[0].mxu0
    %v131 = vadd.f32 %v58, %v130
    %v132 = vpop.f32.mrb[0].mxu0
    %133 = vdwg.mxu0
    %v134 = vxor.u32 %v131, 2147483648
    %v135 = vmul.f32 %v134, 1.442695
    %v136 = vpow.pop %v135
    %v137 = vadd.f32 %v136, 1.0
    %v138 = vrcp.pop %v137
    %v139 = vmul.f32 1.0, %v138
    %141 = vrot.lane.b32.xlu0 %v139, 96
    %v142 = vpop.permute.xlu0 %141
    %v144 = vmul.f32 %v131, %v142
    %v145 = vld [vmem:[%s3] sm:$0xff]
    %v146 = vmul.f32 %v144, 0.5
    %v147 = vmul.f32 %v146, 1.442695
    %v148 = vpow.pop %v147
    %150 = vrot.lane.b32.xlu0 %v148, 112
    %v151 = vpop.permute.xlu0 %150
    %v153 = vmul.f32 %v145, %v151
    %v154 = vadd.f32 %v153, %v144
    %vm155 = vcmask 130048
    %156 = vst.msk [vmem:[#allocation7] sm:$0xff] %vm155, %v154
    %157 = vst.msk [vmem:[#allocation8] sm:$0xff] %vm155, %v144
    %159 = vrot.lane.b32.xlu0 %v144, 112
    %v160 = vpop.permute.xlu0 %159
    %162 = vst.msk [vmem:[#allocation10] sm:$0xff] %vm155, %v160
    // Predicated region
    $region26: #{tpu_custom_call.1} parent=1 // pred_check
      _
    $region27: #{tpu_custom_call.1} parent=1 // pred_check_branch
      %164 = sbr.rel (0) target = $region29
    $region28: #{tpu_custom_call.1} parent=1 // pred_region
      %s166 = ssub.s32 128, 128
      %167 = vsyncadd [#allocation4], %s166
      %s169 = sshll.u32 [#allocation7], 4
      %s170 = int_to_ptr.vmem [resolvable:$true] %s169
      %172 = dma.vmem_to_hbm [thread:$0]  %s170, 128, %s4, [#allocation4]
    $region29: #{tpu_custom_call.1} parent=1 // pred_fallthru
      _
    // Predicated region
    $region30: #{tpu_custom_call.1} parent=1 // pred_check
      _
    $region31: #{tpu_custom_call.1} parent=1 // pred_check_branch
      %174 = sbr.rel (0) target = $region33
    $region32: #{tpu_custom_call.1} parent=1 // pred_region
      %s176 = ssub.s32 128, 128
      %177 = vsyncadd [#allocation9], %s176
      %s179 = sshll.u32 [#allocation8], 4
      %s180 = int_to_ptr.vmem [resolvable:$true] %s179
      %182 = dma.vmem_to_hbm [thread:$0]  %s180, 128, %s5, [#allocation9]
    $region33: #{tpu_custom_call.1} parent=1 // pred_fallthru
      _
    // Predicated region
    $region34: #{tpu_custom_call.1} parent=1 // pred_check
      _
    $region35: #{tpu_custom_call.1} parent=1 // pred_check_branch
      %184 = sbr.rel (0) target = $region37
    $region36: #{tpu_custom_call.1} parent=1 // pred_region
      %s186 = ssub.s32 128, 128
      %187 = vsyncadd [#allocation9], %s186
      %s189 = sshll.u32 [#allocation10], 4
      %s190 = int_to_ptr.vmem [resolvable:$true] %s189
      %192 = dma.vmem_to_hbm [thread:$0]  %s190, 128, %s6, [#allocation9]
    $region37: #{tpu_custom_call.1} parent=1 // pred_fallthru
      _
    // Predicated region
    $region38: #{tpu_custom_call.1} parent=1 // pred_check
      _
    $region39: #{tpu_custom_call.1} parent=1 // pred_check_branch
      %194 = sbr.rel (0) target = $region41
    $region40: #{tpu_custom_call.1} parent=1 // pred_region
      %195 = dma.done [#allocation4], 128
    $region41: #{tpu_custom_call.1} parent=1 // pred_fallthru
      _
    // Predicated region
    $region42: #{tpu_custom_call.1} parent=1 // pred_check
      _
    $region43: #{tpu_custom_call.1} parent=1 // pred_check_branch
      %197 = sbr.rel (0) target = $region45
    $region44: #{tpu_custom_call.1} parent=1 // pred_region
      %198 = dma.done [#allocation9], 128
    $region45: #{tpu_custom_call.1} parent=1 // pred_fallthru
      _
    // Predicated region
    $region46: #{tpu_custom_call.1} parent=1 // pred_check
      _
    $region47: #{tpu_custom_call.1} parent=1 // pred_check_branch
      %200 = sbr.rel (0) target = $region49
    $region48: #{tpu_custom_call.1} parent=1 // pred_region
      %201 = dma.done [#allocation9], 128
    $region49: #{tpu_custom_call.1} parent=1 // pred_fallthru
      _
    %202 = vsyncpa [#allocation3], 1
    %203 = vsyncpa [#allocation6], 1
    %204 = vsyncpa [#allocation4], 1
    %205 = vsyncpa [#allocation9], 1

</llo_original>
